<compile_context>
chip_gen: v7x
topology: tpu7x:2x2x1
jax: 0.10.0
libtpu: 0.0.40
codegen_flags: <defaults>
</compile_context>

<pallas_src>
import jax
import jax.numpy as jnp
from jax.experimental import pallas as pl
from jax.experimental.pallas import tpu as pltpu


def _round_up(n, m):
    return ((n + m - 1) // m) * m


def _softplus(x):
    # PyTorch nn.Softplus semantics (beta=1, threshold=20): x where x > 20,
    # else log1p(exp(x)).  No clamp needed: for x > ~88 exp overflows to +inf only
    # in the UNTAKEN branch and jnp.where still selects x (no NaN produced).
    return jnp.where(x > 20.0, x, jnp.log1p(jnp.exp(x)))


def _tensorcores_per_chip():
    """Best-effort TensorCores-per-chip query (v7x megacore detection)."""
    try:
        info = pltpu.get_tpu_info()
    except Exception:
        return 1
    for attr in ("tensorcores_per_chip", "num_tensorcores", "cores_per_chip",
                 "num_cores"):
        v = getattr(info, attr, None)
        if isinstance(v, int) and v > 0:
            return v
    return 1


def crystal_graph_fc_kernel(x_ref, w1_ref, b1_ref, w2_ref, b2_ref, o_ref):
    # x_ref : (tm, 64)   input row tile (rows on sublanes, 64 features on lanes)
    # w1_ref: (128, 64)  conv_to_fc.weight (PyTorch layout, NOT transposed; resident)
    # b1_ref: (128, 1)   conv_to_fc.bias as a column
    # w2_ref: (1, 128)   fc_out.weight row
    # b2_ref: (1,)       fc_out.bias scalar (SMEM)
    # o_ref : (1, tm)    lane-dense output row (one scalar per input row)

    # One XLU transpose of the raw input tile so all downstream work is lane-dense
    # (rows on lanes).  softplus #1 then uses full 128-lane vregs on the EUP.
    x_t = x_ref[...].T                                                  # (64, tm)
    h = _softplus(x_t)                                                  # EUP

    # conv_to_fc on the MXU: (128, 64) x (64, tm) -> (128, tm); bias adds as a column.
    z = jnp.dot(w1_ref[...], h, preferred_element_type=jnp.float32) + b1_ref[...]
    a = _softplus(z)                                                    # (128, tm)

    # fc_out on the MXU: (1, 128) x (128, tm) -> (1, tm); result is already in the
    # lane-dense output layout, so the store is a plain unmasked (1, tm) write.
    row = jnp.dot(w2_ref[...], a, preferred_element_type=jnp.float32) + b2_ref[0]
    o_ref[...] = row.astype(o_ref.dtype)


def crystal_graph_fc(x, w1, b1, w2, b2, *, tm=4096):
    """x: [N, 64]; w1: [128, 64]; b1: [128]; w2: [1, 128]; b2: [1] -> [N, 1]"""
    N, D_in = x.shape
    assert D_in == 64

    # Row tile: large (amortizes the ~0.35us per-grid-step overhead), multiple of
    # 128 (lane-dense output block), never larger than the 128-rounded batch.
    tm = max(128, min(_round_up(tm, 128), _round_up(N, 128)))
    # Keep >= 2 grid steps only where it pays off: chips with >1 TensorCore (v7x)
    # shard the "parallel" axis across cores; on 1-TC chips it is pure overhead.
    if _tensorcores_per_chip() >= 2 and N > 256:
        tm = min(tm, max(128, _round_up((N + 1) // 2, 128)))

    grid = (pl.cdiv(N, tm),)   # no input padding: partial last block is masked

    w1m = w1.reshape(128, 64)   # untransposed; kernel consumes it directly
    b1c = b1.reshape(128, 1)    # column bias (broadcasts along lanes)
    w2r = w2.reshape(1, 128)
    b2s = b2.reshape(1)         # scalar -> SMEM

    # f32 VMEM footprint ~ (tm*64 double-buffered input) + (64+128+1)*tm temporaries
    # ~= 8 MiB at tm=4096; bump the scoped-VMEM limit only for the large-tile case
    # (v5e defaults to 16 MiB scoped; 48 MiB is under every generation's physical).
    if tm > 2048:
        compiler_params = pltpu.CompilerParams(
            dimension_semantics=("parallel",),
            vmem_limit_bytes=48 * 1024 * 1024)
    else:
        compiler_params = pltpu.CompilerParams(
            dimension_semantics=("parallel",))

    out = pl.pallas_call(
        crystal_graph_fc_kernel,
        out_shape=jax.ShapeDtypeStruct((1, N), x.dtype),
        grid_spec=pltpu.PrefetchScalarGridSpec(
            num_scalar_prefetch=0,
            grid=grid,
            in_specs=[
                pl.BlockSpec((tm, 64), lambda i: (i, 0)),
                pl.BlockSpec((128, 64), lambda i: (0, 0)),   # resident weights
                pl.BlockSpec((128, 1), lambda i: (0, 0)),
                pl.BlockSpec((1, 128), lambda i: (0, 0)),
                pl.BlockSpec(memory_space=pltpu.MemorySpace.SMEM),
            ],
            out_specs=pl.BlockSpec((1, tm), lambda i: (0, i)),
        ),
        compiler_params=compiler_params,
    )(x, w1m, b1c, w2r, b2s)

    # (1, N) -> (N, 1): row-major contiguous either way, so this is a free reshape.
    return out[0].reshape(N, 1)


if __name__ == "__main__":
    key = jax.random.PRNGKey(0)
    k_x, k_x2, k_w1, k_b1, k_w2, k_b2 = jax.random.split(key, 6)

    # Deterministic parameter init (PyTorch Linear-style uniform bounds).
    bound1 = 1.0 / jnp.sqrt(64.0)
    bound2 = 1.0 / jnp.sqrt(128.0)
    w1 = jax.random.uniform(k_w1, (128, 64), jnp.float32, -bound1, bound1)
    b1 = jax.random.uniform(k_b1, (128,), jnp.float32, -bound1, bound1)
    w2 = jax.random.uniform(k_w2, (1, 128), jnp.float32, -bound2, bound2)
    b2 = jax.random.uniform(k_b2, (1,), jnp.float32, -bound2, bound2)

    def ref_fwd(v):
        sp = lambda t: jnp.where(t > 20.0, t, jnp.log1p(jnp.exp(jnp.minimum(t, 20.0))))
        return sp(sp(v) @ w1.T + b1) @ w2.T + b2

    # Small batch: single partial block (16 valid rows inside a 128-row tile).
    x_small = jax.random.normal(k_x, (16, 64), jnp.float32)
    out_small = jax.block_until_ready(crystal_graph_fc(x_small, w1, b1, w2, b2))
    assert out_small.shape == (16, 1)
    assert jnp.allclose(out_small, ref_fwd(x_small), atol=1e-5, rtol=1e-5)

    # Batch not a multiple of 128: exercises the masked tail without any jnp.pad.
    x_big = jax.random.normal(k_x2, (300, 64), jnp.float32)
    out_big = jax.block_until_ready(crystal_graph_fc(x_big, w1, b1, w2, b2))
    assert out_big.shape == (300, 1)
    assert jnp.allclose(out_big, ref_fwd(x_big), atol=1e-5, rtol=1e-5)
    assert bool(jnp.all(jnp.isfinite(out_big)))  # no NaN/Inf leaked from the tail

    print("KERNEL_OK")
</pallas_src>

<mosaic_0001>
module attributes {stable_mosaic.version = 11 : i64} {
  func.func @crystal_graph_fc_kernel(%arg0: i32, %arg1: memref<128x64xf32, #tpu.memory_space<vmem>>, %arg2: memref<128x64xf32, #tpu.memory_space<vmem>>, %arg3: memref<128x1xf32, #tpu.memory_space<vmem>>, %arg4: memref<1x128xf32, #tpu.memory_space<vmem>>, %arg5: memref<1xf32, #tpu.memory_space<smem>>, %arg6: memref<1x128xf32, #tpu.memory_space<vmem>>) attributes {dimension_semantics = [#tpu.dimension_semantics<parallel>], iteration_bounds = array<i64: 1>, scalar_prefetch = 0 : i64, scratch_operands = 0 : i64, tpu.core_type = #tpu.core_type<tc>, window_params = [{transform_indices = @transform_0, window_bounds = array<i64: 128, 64>}, {pipeline_mode = #tpu.pipeline_mode<synchronous>, transform_indices = @transform_1, window_bounds = array<i64: 128, 64>}, {pipeline_mode = #tpu.pipeline_mode<synchronous>, transform_indices = @transform_2, window_bounds = array<i64: 128, 1>}, {pipeline_mode = #tpu.pipeline_mode<synchronous>, transform_indices = @transform_3, window_bounds = array<i64: 1, 128>}, {transform_indices = @transform_4, window_bounds = array<i64: 1>}, {transform_indices = @transform_5, window_bounds = array<i64: 1, 128>}]} {
    %c0 = arith.constant 0 : index
    %c0_0 = arith.constant 0 : index
    %0 = vector.load %arg1[%c0, %c0_0] : memref<128x64xf32, #tpu.memory_space<vmem>>, vector<128x64xf32>
    %1 = tpu.transpose %0, [1, 0] : vector<128x64xf32> -> vector<64x128xf32>
    %cst = arith.constant 2.000000e+01 : f32
    %2 = vector.broadcast %cst : f32 to vector<64x128xf32>
    %3 = arith.cmpf ogt, %1, %2 : vector<64x128xf32>
    %4 = math.exp %1 : vector<64x128xf32>
    %5 = math.log1p %4 : vector<64x128xf32>
    %6 = arith.select %3, %1, %5 : vector<64x128xi1>, vector<64x128xf32>
    %c0_1 = arith.constant 0 : index
    %c0_2 = arith.constant 0 : index
    %7 = vector.load %arg2[%c0_1, %c0_2] : memref<128x64xf32, #tpu.memory_space<vmem>>, vector<128x64xf32>
    %cst_3 = arith.constant dense<0.000000e+00> : vector<128x128xf32>
    %8 = tpu.matmul %7, %6, %cst_3 {dimension_numbers = #tpu.dot_dimension_numbers<[1], [0], [0], [1], [0, 0, 1, 1], [], []>} : vector<128x64xf32>, vector<64x128xf32>, vector<128x128xf32> -> vector<128x128xf32>
    %c0_4 = arith.constant 0 : index
    %c0_5 = arith.constant 0 : index
    %9 = vector.load %arg3[%c0_4, %c0_5] : memref<128x1xf32, #tpu.memory_space<vmem>>, vector<128x1xf32>
    %10 = vector.broadcast %9 : vector<128x1xf32> to vector<128x128xf32>
    %11 = arith.addf %8, %10 : vector<128x128xf32>
    %cst_6 = arith.constant 2.000000e+01 : f32
    %12 = vector.broadcast %cst_6 : f32 to vector<128x128xf32>
    %13 = arith.cmpf ogt, %11, %12 : vector<128x128xf32>
    %14 = math.exp %11 : vector<128x128xf32>
    %15 = math.log1p %14 : vector<128x128xf32>
    %16 = arith.select %13, %11, %15 : vector<128x128xi1>, vector<128x128xf32>
    %c0_7 = arith.constant 0 : index
    %c0_8 = arith.constant 0 : index
    %17 = vector.load %arg4[%c0_7, %c0_8] : memref<1x128xf32, #tpu.memory_space<vmem>>, vector<1x128xf32>
    %cst_9 = arith.constant dense<0.000000e+00> : vector<1x128xf32>
    %18 = tpu.matmul %17, %16, %cst_9 {dimension_numbers = #tpu.dot_dimension_numbers<[1], [0], [0], [1], [0, 0, 1, 1], [], []>} : vector<1x128xf32>, vector<128x128xf32>, vector<1x128xf32> -> vector<1x128xf32>
    %c0_10 = arith.constant 0 : index
    %19 = memref.load %arg5[%c0_10] : memref<1xf32, #tpu.memory_space<smem>>
    %20 = vector.broadcast %19 : f32 to vector<1x128xf32>
    %21 = arith.addf %18, %20 : vector<1x128xf32>
    %c0_11 = arith.constant 0 : index
    %c0_12 = arith.constant 0 : index
    %22 = vector.load %arg6[%c0_11, %c0_12] : memref<1x128xf32, #tpu.memory_space<vmem>>, vector<1x128xf32>
    tpu.vector_store %arg6[%c0_11, %c0_12], %21 {strides = array<i32>} : memref<1x128xf32, #tpu.memory_space<vmem>>, vector<1x128xf32>,
    return
  }
  func.func @transform_0(%arg0: i32) -> (i32, i32) {
    %c0_i32 = arith.constant 0 : i32
    %c0_i32_0 = arith.constant 0 : i32
    return %arg0, %c0_i32 : i32, i32
  }
  func.func @transform_1(%arg0: i32) -> (i32, i32) {
    %c0_i32 = arith.constant 0 : i32
    %c0_i32_0 = arith.constant 0 : i32
    %c0_i32_1 = arith.constant 0 : i32
    return %c0_i32, %c0_i32_0 : i32, i32
  }
  func.func @transform_2(%arg0: i32) -> (i32, i32) {
    %c0_i32 = arith.constant 0 : i32
    %c0_i32_0 = arith.constant 0 : i32
    %c0_i32_1 = arith.constant 0 : i32
    return %c0_i32, %c0_i32_0 : i32, i32
  }
  func.func @transform_3(%arg0: i32) -> (i32, i32) {
    %c0_i32 = arith.constant 0 : i32
    %c0_i32_0 = arith.constant 0 : i32
    %c0_i32_1 = arith.constant 0 : i32
    return %c0_i32, %c0_i32_0 : i32, i32
  }
  func.func @transform_4(%arg0: i32) -> i32 {
    %c0_i32 = arith.constant 0 : i32
    %c0_i32_0 = arith.constant 0 : i32
    return %c0_i32 : i32
  }
  func.func @transform_5(%arg0: i32) -> (i32, i32) {
    %c0_i32 = arith.constant 0 : i32
    %c0_i32_0 = arith.constant 0 : i32
    return %c0_i32, %arg0 : i32, i32
  }
}

</mosaic_0001>

<llo_original>
// kernel: tpu_custom_call.1
$region0: #{tpu_custom_call.1}
  #allocation0 [shape = 'u32[]', space=smem, size = 0x4, offset = 0x4, fixed_abs, tag = 'smem constant byte address 0x4 - core index']
  #allocation1 [shape = 'u32[144,128]{1,0:T(1,128)}', space=vmem, size = 0x12000, scoped, tag = 'internal scratch']
  #allocation2 [shape = 'f32[1]{0:T(128)S(6)}', space=smem, size = 0x200, scoped, tag = 'scoped memory for tpu_custom_call.1']
  %s0 = inlined_call_operand.vmem [shape: f32[16,64], index: 0, kind: input, shape index: {}]
  %s1 = inlined_call_operand.vmem [shape: f32[128,64], index: 1, kind: input, shape index: {}]
  %s2 = inlined_call_operand.vmem [shape: f32[128,1], index: 2, kind: input, shape index: {}]
  %s3 = inlined_call_operand.vmem [shape: f32[1,128], index: 3, kind: input, shape index: {}]
  %s4 = inlined_call_operand.<no memory space> [shape: f32[1], index: 4, kind: input, shape index: {}]
  %s5 = inlined_call_operand.hbm [shape: f32[1,16], index: 5, kind: output, shape index: {}]
  %s6 = sld [smem:[#allocation0]]
  $region30: #{tpu_custom_call.1} parent=0
    _
  %s8 = ssub.s32 1, %s6
  %s9 = scalar_select 0, %s8, %s6
  %10 = sst [smem:[#allocation2]] %s4
  $region1: #{tpu_custom_call.1} parent=0
    #allocation3 [shape = 'u8[512]{0}', space=vmem, size = 0x400, scoped, tag = 'output window, operand 0, single buffered']
    #allocation4 [shape = 's32[1]{0}', space=sflag, size = 0x4, scoped, tag = 'scoped memory for tpu_custom_call.1']
    %11 = vsyncpa [#allocation4], 0
    // Predicated region
    $region2: #{tpu_custom_call.1} parent=1 // pred_check
      _
    $region3: #{tpu_custom_call.1} parent=1 // pred_check_branch
      %13 = sbr.rel (0) target = $region5
    $region4: #{tpu_custom_call.1} parent=1 // pred_region
      _
    $region5: #{tpu_custom_call.1} parent=1 // pred_fallthru
      _
    // Predicated region
    $region6: #{tpu_custom_call.1} parent=1 // pred_check
      _
    $region7: #{tpu_custom_call.1} parent=1 // pred_check_branch
      %15 = sbr.rel (0) target = $region9
    $region8: #{tpu_custom_call.1} parent=1 // pred_region
      _
    $region9: #{tpu_custom_call.1} parent=1 // pred_fallthru
      _
    // Predicated region
    $region10: #{tpu_custom_call.1} parent=1 // pred_check
      _
    $region11: #{tpu_custom_call.1} parent=1 // pred_check_branch
      %17 = sbr.rel (0) target = $region13
    $region12: #{tpu_custom_call.1} parent=1 // pred_region
      _
    $region13: #{tpu_custom_call.1} parent=1 // pred_fallthru
      _
    // Predicated region
    $region14: #{tpu_custom_call.1} parent=1 // pred_check
      _
    $region15: #{tpu_custom_call.1} parent=1 // pred_check_branch
      %19 = sbr.rel (0) target = $region17
    $region16: #{tpu_custom_call.1} parent=1 // pred_region
      _
    $region17: #{tpu_custom_call.1} parent=1 // pred_fallthru
      _
    // Predicated region
    $region18: #{tpu_custom_call.1} parent=1 // pred_check
      _
    $region19: #{tpu_custom_call.1} parent=1 // pred_check_branch
      %21 = sbr.rel (0) target = $region21
    $region20: #{tpu_custom_call.1} parent=1 // pred_region
      _
    $region21: #{tpu_custom_call.1} parent=1 // pred_fallthru
      _
    %v22 = vld [vmem:[%s0] sm:$0xff]
    %v23 = vld [vmem:[%s0 + $0x8] sm:$0xff]
    %v24 = vld [vmem:[%s0 + $0x10] sm:$0xff]
    %v25 = vld [vmem:[%s0 + $0x18] sm:$0xff]
    %v26 = vld [vmem:[%s0 + $0x20] sm:$0xff]
    %v27 = vld [vmem:[%s0 + $0x28] sm:$0xff]
    %v28 = vld [vmem:[%s0 + $0x30] sm:$0xff]
    %v29 = vld [vmem:[%s0 + $0x38] sm:$0xff]
    %v30 = vld [vmem:[%s0 + $0x40] sm:$0xff]
    %v31 = vld [vmem:[%s0 + $0x48] sm:$0xff]
    %v32 = vld [vmem:[%s0 + $0x50] sm:$0xff]
    %v33 = vld [vmem:[%s0 + $0x58] sm:$0xff]
    %v34 = vld [vmem:[%s0 + $0x60] sm:$0xff]
    %v35 = vld [vmem:[%s0 + $0x68] sm:$0xff]
    %v36 = vld [vmem:[%s0 + $0x70] sm:$0xff]
    %v37 = vld [vmem:[%s0 + $0x78] sm:$0xff]
    %38 = vxpose.xlu0.b32.start [1/16] %v22, 128
    %39 = vxpose.xlu0.b32.cont [2/16] %v23, 128
    %40 = vxpose.xlu0.b32.cont [3/16] %v24, 128
    %41 = vxpose.xlu0.b32.cont [4/16] %v25, 128
    %42 = vxpose.xlu0.b32.cont [5/16] %v26, 128
    %43 = vxpose.xlu0.b32.cont [6/16] %v27, 128
    %44 = vxpose.xlu0.b32.cont [7/16] %v28, 128
    %45 = vxpose.xlu0.b32.cont [8/16] %v29, 128
    %46 = vxpose.xlu0.b32.cont [9/16] %v30, 128
    %47 = vxpose.xlu0.b32.cont [10/16] %v31, 128
    %48 = vxpose.xlu0.b32.cont [11/16] %v32, 128
    %49 = vxpose.xlu0.b32.cont [12/16] %v33, 128
    %50 = vxpose.xlu0.b32.cont [13/16] %v34, 128
    %51 = vxpose.xlu0.b32.cont [14/16] %v35, 128
    %52 = vxpose.xlu0.b32.cont [15/16] %v36, 128
    %53 = vxpose.xlu0.b32.end [16/16] %v37, 128
    %v54 = vpop.trf.xlu0
    %v55 = vpop.trf.xlu0
    %v56 = vpop.trf.xlu0
    %v57 = vpop.trf.xlu0
    %v58 = vpop.trf.xlu0
    %v59 = vpop.trf.xlu0
    %v60 = vpop.trf.xlu0
    %v61 = vpop.trf.xlu0
    %v62 = vpop.trf.xlu0
    %v63 = vpop.trf.xlu0
    %v64 = vpop.trf.xlu0
    %v65 = vpop.trf.xlu0
    %v66 = vpop.trf.xlu0
    %v67 = vpop.trf.xlu0
    %v68 = vpop.trf.xlu0
    %v69 = vpop.trf.xlu0
    %vm70 = vcmp.gt.f32.partialorder %v54, 20.0
    %vm71 = vcmp.gt.f32.partialorder %v55, 20.0
    %vm72 = vcmp.gt.f32.partialorder %v56, 20.0
    %vm73 = vcmp.gt.f32.partialorder %v57, 20.0
    %vm74 = vcmp.gt.f32.partialorder %v58, 20.0
    %vm75 = vcmp.gt.f32.partialorder %v59, 20.0
    %vm76 = vcmp.gt.f32.partialorder %v60, 20.0
    %vm77 = vcmp.gt.f32.partialorder %v61, 20.0
    %v78 = vmul.f32 %v54, 1.442695
    %v79 = vpow.pop %v78
    %v80 = vmul.f32 %v55, 1.442695
    %v81 = vpow.pop %v80
    %v82 = vmul.f32 %v56, 1.442695
    %v83 = vpow.pop %v82
    %v84 = vmul.f32 %v57, 1.442695
    %v85 = vpow.pop %v84
    %v86 = vmul.f32 %v58, 1.442695
    %v87 = vpow.pop %v86
    %v88 = vmul.f32 %v59, 1.442695
    %v89 = vpow.pop %v88
    %v90 = vmul.f32 %v60, 1.442695
    %v91 = vpow.pop %v90
    %v92 = vmul.f32 %v61, 1.442695
    %v93 = vpow.pop %v92
    %v94 = vadd.f32 %v79, 1.0
    %v95 = vlog2.pop %v94
    %v96 = vmul.f32 %v95, 0.6931472
    %v97 = vmul.f32 -0.5, %v79
    %v98 = vadd.f32 %v97, 1.0
    %v99 = vmul.f32 %v98, %v79
    %v100 = vand.u32 2147483647, %v79
    %vm101 = vcmp.lt.f32.partialorder %v100, 0.0004427343
    %v102 = vsel %vm101, %v99, %v96
    %v103 = vadd.f32 %v81, 1.0
    %v104 = vlog2.pop %v103
    %v105 = vmul.f32 %v104, 0.6931472
    %v106 = vmul.f32 -0.5, %v81
    %v107 = vadd.f32 %v106, 1.0
    %v108 = vmul.f32 %v107, %v81
    %v109 = vand.u32 2147483647, %v81
    %vm110 = vcmp.lt.f32.partialorder %v109, 0.0004427343
    %v111 = vsel %vm110, %v108, %v105
    %v112 = vadd.f32 %v83, 1.0
    %v113 = vlog2.pop %v112
    %v114 = vmul.f32 %v113, 0.6931472
    %v115 = vmul.f32 -0.5, %v83
    %v116 = vadd.f32 %v115, 1.0
    %v117 = vmul.f32 %v116, %v83
    %v118 = vand.u32 2147483647, %v83
    %vm119 = vcmp.lt.f32.partialorder %v118, 0.0004427343
    %v120 = vsel %vm119, %v117, %v114
    %v121 = vadd.f32 %v85, 1.0
    %v122 = vlog2.pop %v121
    %v123 = vmul.f32 %v122, 0.6931472
    %v124 = vmul.f32 -0.5, %v85
    %v125 = vadd.f32 %v124, 1.0
    %v126 = vmul.f32 %v125, %v85
    %v127 = vand.u32 2147483647, %v85
    %vm128 = vcmp.lt.f32.partialorder %v127, 0.0004427343
    %v129 = vsel %vm128, %v126, %v123
    %v130 = vadd.f32 %v87, 1.0
    %v131 = vlog2.pop %v130
    %v132 = vmul.f32 %v131, 0.6931472
    %v133 = vmul.f32 -0.5, %v87
    %v134 = vadd.f32 %v133, 1.0
    %v135 = vmul.f32 %v134, %v87
    %v136 = vand.u32 2147483647, %v87
    %vm137 = vcmp.lt.f32.partialorder %v136, 0.0004427343
    %v138 = vsel %vm137, %v135, %v132
    %v139 = vadd.f32 %v89, 1.0
    %v140 = vlog2.pop %v139
    %v141 = vmul.f32 %v140, 0.6931472
    %v142 = vmul.f32 -0.5, %v89
    %v143 = vadd.f32 %v142, 1.0
    %v144 = vmul.f32 %v143, %v89
    %v145 = vand.u32 2147483647, %v89
    %vm146 = vcmp.lt.f32.partialorder %v145, 0.0004427343
    %v147 = vsel %vm146, %v144, %v141
    %v148 = vadd.f32 %v91, 1.0
    %v149 = vlog2.pop %v148
    %v150 = vmul.f32 %v149, 0.6931472
    %v151 = vmul.f32 -0.5, %v91
    %v152 = vadd.f32 %v151, 1.0
    %v153 = vmul.f32 %v152, %v91
    %v154 = vand.u32 2147483647, %v91
    %vm155 = vcmp.lt.f32.partialorder %v154, 0.0004427343
    %v156 = vsel %vm155, %v153, %v150
    %v157 = vadd.f32 %v93, 1.0
    %v158 = vlog2.pop %v157
    %v159 = vmul.f32 %v158, 0.6931472
    %v160 = vmul.f32 -0.5, %v93
    %v161 = vadd.f32 %v160, 1.0
    %v162 = vmul.f32 %v161, %v93
    %v163 = vand.u32 2147483647, %v93
    %vm164 = vcmp.lt.f32.partialorder %v163, 0.0004427343
    %v165 = vsel %vm164, %v162, %v159
    %v166 = vsel %vm70, %v54, %v102
    %v167 = vsel %vm71, %v55, %v111
    %v168 = vsel %vm72, %v56, %v120
    %v169 = vsel %vm73, %v57, %v129
    %v170 = vsel %vm74, %v58, %v138
    %v171 = vsel %vm75, %v59, %v147
    %v172 = vsel %vm76, %v60, %v156
    %v173 = vsel %vm77, %v61, %v165
    %v174 = vld [vmem:[%s1] sm:$0xff]
    %v175 = vld [vmem:[%s1 + $0x8] sm:$0xff]
    %v176 = vld [vmem:[%s1 + $0x10] sm:$0xff]
    %v177 = vld [vmem:[%s1 + $0x18] sm:$0xff]
    %v178 = vld [vmem:[%s1 + $0x20] sm:$0xff]
    %v179 = vld [vmem:[%s1 + $0x28] sm:$0xff]
    %v180 = vld [vmem:[%s1 + $0x30] sm:$0xff]
    %v181 = vld [vmem:[%s1 + $0x38] sm:$0xff]
    %v182 = vld [vmem:[%s1 + $0x40] sm:$0xff]
    %v183 = vld [vmem:[%s1 + $0x48] sm:$0xff]
    %v184 = vld [vmem:[%s1 + $0x50] sm:$0xff]
    %v185 = vld [vmem:[%s1 + $0x58] sm:$0xff]
    %v186 = vld [vmem:[%s1 + $0x60] sm:$0xff]
    %v187 = vld [vmem:[%s1 + $0x68] sm:$0xff]
    %v188 = vld [vmem:[%s1 + $0x70] sm:$0xff]
    %v189 = vld [vmem:[%s1 + $0x78] sm:$0xff]
    %v190 = vld [vmem:[%s2] sm:$0xff]
    %v191 = vld [vmem:[%s2 + $0x8] sm:$0xff]
    %v192 = vld [vmem:[%s2 + $0x10] sm:$0xff]
    %v193 = vld [vmem:[%s2 + $0x18] sm:$0xff]
    %v194 = vld [vmem:[%s2 + $0x20] sm:$0xff]
    %v195 = vld [vmem:[%s2 + $0x28] sm:$0xff]
    %v196 = vld [vmem:[%s2 + $0x30] sm:$0xff]
    %v197 = vld [vmem:[%s2 + $0x38] sm:$0xff]
    %v198 = vld [vmem:[%s2 + $0x40] sm:$0xff]
    %v199 = vld [vmem:[%s2 + $0x48] sm:$0xff]
    %v200 = vld [vmem:[%s2 + $0x50] sm:$0xff]
    %v201 = vld [vmem:[%s2 + $0x58] sm:$0xff]
    %v202 = vld [vmem:[%s2 + $0x60] sm:$0xff]
    %v203 = vld [vmem:[%s2 + $0x68] sm:$0xff]
    %v204 = vld [vmem:[%s2 + $0x70] sm:$0xff]
    %v205 = vld [vmem:[%s2 + $0x78] sm:$0xff]
    %207 = vset.pattern.permute.xlu0 0
    %208 = vperm.xlu0 %207, %v190
    %v209 = vpop.permute.xlu0 %208
    %212 = vset.pattern.permute.xlu0 0
    %213 = vperm.xlu0 %212, %v191
    %v214 = vpop.permute.xlu0 %213
    %217 = vset.pattern.permute.xlu0 0
    %218 = vperm.xlu0 %217, %v192
    %v219 = vpop.permute.xlu0 %218
    %222 = vset.pattern.permute.xlu0 0
    %223 = vperm.xlu0 %222, %v193
    %v224 = vpop.permute.xlu0 %223
    %227 = vset.pattern.permute.xlu0 0
    %228 = vperm.xlu0 %227, %v194
    %v229 = vpop.permute.xlu0 %228
    %232 = vset.pattern.permute.xlu0 0
    %233 = vperm.xlu0 %232, %v195
    %v234 = vpop.permute.xlu0 %233
    %237 = vset.pattern.permute.xlu0 0
    %238 = vperm.xlu0 %237, %v196
    %v239 = vpop.permute.xlu0 %238
    %242 = vset.pattern.permute.xlu0 0
    %243 = vperm.xlu0 %242, %v197
    %v244 = vpop.permute.xlu0 %243
    %247 = vset.pattern.permute.xlu0 0
    %248 = vperm.xlu0 %247, %v198
    %v249 = vpop.permute.xlu0 %248
    %252 = vset.pattern.permute.xlu0 0
    %253 = vperm.xlu0 %252, %v199
    %v254 = vpop.permute.xlu0 %253
    %257 = vset.pattern.permute.xlu0 0
    %258 = vperm.xlu0 %257, %v200
    %v259 = vpop.permute.xlu0 %258
    %262 = vset.pattern.permute.xlu0 0
    %263 = vperm.xlu0 %262, %v201
    %v264 = vpop.permute.xlu0 %263
    %267 = vset.pattern.permute.xlu0 0
    %268 = vperm.xlu0 %267, %v202
    %v269 = vpop.permute.xlu0 %268
    %272 = vset.pattern.permute.xlu0 0
    %273 = vperm.xlu0 %272, %v203
    %v274 = vpop.permute.xlu0 %273
    %277 = vset.pattern.permute.xlu0 0
    %278 = vperm.xlu0 %277, %v204
    %v279 = vpop.permute.xlu0 %278
    %282 = vset.pattern.permute.xlu0 0
    %283 = vperm.xlu0 %282, %v205
    %v284 = vpop.permute.xlu0 %283
    %vm286 = vcmask 523264
    %v288 = vsel %vm286, %v174, 0
    %v291 = vsel %vm286, %v175, 0
    %v294 = vsel %vm286, %v176, 0
    %v297 = vsel %vm286, %v177, 0
    %v300 = vsel %vm286, %v178, 0
    %v303 = vsel %vm286, %v179, 0
    %v306 = vsel %vm286, %v180, 0
    %v309 = vsel %vm286, %v181, 0
    %v312 = vsel %vm286, %v182, 0
    %v315 = vsel %vm286, %v183, 0
    %v318 = vsel %vm286, %v184, 0
    %v321 = vsel %vm286, %v185, 0
    %v324 = vsel %vm286, %v186, 0
    %v327 = vsel %vm286, %v187, 0
    %v330 = vsel %vm286, %v188, 0
    %v333 = vsel %vm286, %v189, 0
    %335 = vmatprep.subr.mxu0 0.0
    %336 = vmatpush1.msra.mxu0 %v166
    %337 = vmatprep.subr.mxu0 0.0
    %338 = vmatpush1.msra.mxu0 %v167
    %339 = vmatprep.subr.mxu0 0.0
    %340 = vmatpush1.msra.mxu0 %v168
    %341 = vmatprep.subr.mxu0 0.0
    %342 = vmatpush1.msra.mxu0 %v169
    %343 = vmatprep.subr.mxu0 0.0
    %344 = vmatpush1.msra.mxu0 %v170
    %345 = vmatprep.subr.mxu0 0.0
    %346 = vmatpush1.msra.mxu0 %v171
    %347 = vmatprep.subr.mxu0 0.0
    %348 = vmatpush1.msra.mxu0 %v172
    %349 = vmatprep.subr.mxu0 0.0
    %350 = vmatpush1.msra.mxu0 %v173
    %351 = vmatprep.subr.mxu0 0.0
    %352 = vmatpush1.msra.mxu0 0.0
    %353 = vmatprep.subr.mxu0 0.0
    %354 = vmatpush1.msra.mxu0 0.0
    %355 = vmatprep.subr.mxu0 0.0
    %356 = vmatpush1.msra.mxu0 0.0
    %357 = vmatprep.subr.mxu0 0.0
    %358 = vmatpush1.msra.mxu0 0.0
    %359 = vmatprep.subr.mxu0 0.0
    %360 = vmatpush1.msra.mxu0 0.0
    %361 = vmatprep.subr.mxu0 0.0
    %362 = vmatpush1.msra.mxu0 0.0
    %363 = vmatprep.subr.mxu0 0.0
    %364 = vmatpush1.msra.mxu0 0.0
    %365 = vmatprep.subr.mxu0 0.0
    %366 = vmatpush1.msra.mxu0 0.0
    %367 = vmatprep.subr.mxu0 0.0
    %368 = vmatpush1.msra.mxu0 0.0
    %369 = vmatprep.subr.mxu0 0.0
    %370 = vmatpush1.msra.mxu0 0.0
    %371 = vmatprep.subr.mxu0 0.0
    %372 = vmatpush1.msra.mxu0 0.0
    %373 = vmatprep.subr.mxu0 0.0
    %374 = vmatpush1.msra.mxu0 0.0
    %375 = vmatprep.subr.mxu0 0.0
    %376 = vmatpush1.msra.mxu0 0.0
    %377 = vmatprep.subr.mxu0 0.0
    %378 = vmatpush1.msra.mxu0 0.0
    %379 = vmatprep.subr.mxu0 0.0
    %380 = vmatpush1.msra.mxu0 0.0
    %381 = vmatprep.subr.mxu0 0.0
    %382 = vmatpush1.msra.mxu0 0.0
    %383 = vmatprep.subr.mxu0 0.0
    %384 = vmatpush1.msra.mxu0 0.0
    %385 = vmatprep.subr.mxu0 0.0
    %386 = vmatpush1.msra.mxu0 0.0
    %387 = vmatprep.subr.mxu0 0.0
    %388 = vmatpush1.msra.mxu0 0.0
    %389 = vmatprep.subr.mxu0 0.0
    %390 = vmatpush1.msra.mxu0 0.0
    %391 = vmatprep.subr.mxu0 0.0
    %392 = vmatpush1.msra.mxu0 0.0
    %393 = vmatprep.subr.mxu0 0.0
    %394 = vmatpush1.msra.mxu0 0.0
    %395 = vmatprep.subr.mxu0 0.0
    %396 = vmatpush1.msra.mxu0 0.0
    %397 = vmatprep.subr.mxu0 0.0
    %398 = vmatpush1.msra.mxu0 0.0
    %399 = vmatprep.mubr.f32.mxu0 0.0
    %400 = vmatmul.mubr.f32.gmra.mrb[0].mxu0 %v288
    %v401 = vpop.f32.mrb[0].mxu0
    %v402 = vadd.f32 %v209, %v401
    %v403 = vpop.f32.mrb[0].mxu0
    %404 = vmatprep.mubr.f32.mxu0 0.0
    %405 = vmatmul.mubr.f32.gmra.mrb[0].mxu0 %v291
    %v406 = vpop.f32.mrb[0].mxu0
    %v407 = vadd.f32 %v214, %v406
    %v408 = vpop.f32.mrb[0].mxu0
    %409 = vmatprep.mubr.f32.mxu0 0.0
    %410 = vmatmul.mubr.f32.gmra.mrb[0].mxu0 %v294
    %v411 = vpop.f32.mrb[0].mxu0
    %v412 = vadd.f32 %v219, %v411
    %v413 = vpop.f32.mrb[0].mxu0
    %414 = vmatprep.mubr.f32.mxu0 0.0
    %415 = vmatmul.mubr.f32.gmra.mrb[0].mxu0 %v297
    %v416 = vpop.f32.mrb[0].mxu0
    %v417 = vadd.f32 %v224, %v416
    %v418 = vpop.f32.mrb[0].mxu0
    %419 = vmatprep.mubr.f32.mxu0 0.0
    %420 = vmatmul.mubr.f32.gmra.mrb[0].mxu0 %v300
    %v421 = vpop.f32.mrb[0].mxu0
    %v422 = vadd.f32 %v229, %v421
    %v423 = vpop.f32.mrb[0].mxu0
    %424 = vmatprep.mubr.f32.mxu0 0.0
    %425 = vmatmul.mubr.f32.gmra.mrb[0].mxu0 %v303
    %v426 = vpop.f32.mrb[0].mxu0
    %v427 = vadd.f32 %v234, %v426
    %v428 = vpop.f32.mrb[0].mxu0
    %429 = vmatprep.mubr.f32.mxu0 0.0
    %430 = vmatmul.mubr.f32.gmra.mrb[0].mxu0 %v306
    %v431 = vpop.f32.mrb[0].mxu0
    %v432 = vadd.f32 %v239, %v431
    %v433 = vpop.f32.mrb[0].mxu0
    %434 = vmatprep.mubr.f32.mxu0 0.0
    %435 = vmatmul.mubr.f32.gmra.mrb[0].mxu0 %v309
    %v436 = vpop.f32.mrb[0].mxu0
    %v437 = vadd.f32 %v244, %v436
    %v438 = vpop.f32.mrb[0].mxu0
    %439 = vmatprep.mubr.f32.mxu0 0.0
    %440 = vmatmul.mubr.f32.gmra.mrb[0].mxu0 %v312
    %v441 = vpop.f32.mrb[0].mxu0
    %v442 = vadd.f32 %v249, %v441
    %v443 = vpop.f32.mrb[0].mxu0
    %444 = vmatprep.mubr.f32.mxu0 0.0
    %445 = vmatmul.mubr.f32.gmra.mrb[0].mxu0 %v315
    %v446 = vpop.f32.mrb[0].mxu0
    %v447 = vadd.f32 %v254, %v446
    %v448 = vpop.f32.mrb[0].mxu0
    %449 = vmatprep.mubr.f32.mxu0 0.0
    %450 = vmatmul.mubr.f32.gmra.mrb[0].mxu0 %v318
    %v451 = vpop.f32.mrb[0].mxu0
    %v452 = vadd.f32 %v259, %v451
    %v453 = vpop.f32.mrb[0].mxu0
    %454 = vmatprep.mubr.f32.mxu0 0.0
    %455 = vmatmul.mubr.f32.gmra.mrb[0].mxu0 %v321
    %v456 = vpop.f32.mrb[0].mxu0
    %v457 = vadd.f32 %v264, %v456
    %v458 = vpop.f32.mrb[0].mxu0
    %459 = vmatprep.mubr.f32.mxu0 0.0
    %460 = vmatmul.mubr.f32.gmra.mrb[0].mxu0 %v324
    %v461 = vpop.f32.mrb[0].mxu0
    %v462 = vadd.f32 %v269, %v461
    %v463 = vpop.f32.mrb[0].mxu0
    %464 = vmatprep.mubr.f32.mxu0 0.0
    %465 = vmatmul.mubr.f32.gmra.mrb[0].mxu0 %v327
    %v466 = vpop.f32.mrb[0].mxu0
    %v467 = vadd.f32 %v274, %v466
    %v468 = vpop.f32.mrb[0].mxu0
    %469 = vmatprep.mubr.f32.mxu0 0.0
    %470 = vmatmul.mubr.f32.gmra.mrb[0].mxu0 %v330
    %v471 = vpop.f32.mrb[0].mxu0
    %v472 = vadd.f32 %v279, %v471
    %v473 = vpop.f32.mrb[0].mxu0
    %474 = vmatprep.mubr.f32.mxu0 0.0
    %475 = vmatmul.mubr.f32.gmra.mrb[0].mxu0 %v333
    %v476 = vpop.f32.mrb[0].mxu0
    %v477 = vadd.f32 %v284, %v476
    %v478 = vpop.f32.mrb[0].mxu0
    %479 = vdwg.mxu0
    %vm480 = vcmp.gt.f32.partialorder %v402, 20.0
    %vm481 = vcmp.gt.f32.partialorder %v407, 20.0
    %vm482 = vcmp.gt.f32.partialorder %v412, 20.0
    %vm483 = vcmp.gt.f32.partialorder %v417, 20.0
    %vm484 = vcmp.gt.f32.partialorder %v422, 20.0
    %vm485 = vcmp.gt.f32.partialorder %v427, 20.0
    %vm486 = vcmp.gt.f32.partialorder %v432, 20.0
    %vm487 = vcmp.gt.f32.partialorder %v437, 20.0
    %vm488 = vcmp.gt.f32.partialorder %v442, 20.0
    %vm489 = vcmp.gt.f32.partialorder %v447, 20.0
    %vm490 = vcmp.gt.f32.partialorder %v452, 20.0
    %vm491 = vcmp.gt.f32.partialorder %v457, 20.0
    %vm492 = vcmp.gt.f32.partialorder %v462, 20.0
    %vm493 = vcmp.gt.f32.partialorder %v467, 20.0
    %vm494 = vcmp.gt.f32.partialorder %v472, 20.0
    %vm495 = vcmp.gt.f32.partialorder %v477, 20.0
    %v496 = vmul.f32 %v402, 1.442695
    %v497 = vpow.pop %v496
    %v498 = vmul.f32 %v407, 1.442695
    %v499 = vpow.pop %v498
    %v500 = vmul.f32 %v412, 1.442695
    %v501 = vpow.pop %v500
    %v502 = vmul.f32 %v417, 1.442695
    %v503 = vpow.pop %v502
    %v504 = vmul.f32 %v422, 1.442695
    %v505 = vpow.pop %v504
    %v506 = vmul.f32 %v427, 1.442695
    %v507 = vpow.pop %v506
    %v508 = vmul.f32 %v432, 1.442695
    %v509 = vpow.pop %v508
    %v510 = vmul.f32 %v437, 1.442695
    %v511 = vpow.pop %v510
    %v512 = vmul.f32 %v442, 1.442695
    %v513 = vpow.pop %v512
    %v514 = vmul.f32 %v447, 1.442695
    %v515 = vpow.pop %v514
    %v516 = vmul.f32 %v452, 1.442695
    %v517 = vpow.pop %v516
    %v518 = vmul.f32 %v457, 1.442695
    %v519 = vpow.pop %v518
    %v520 = vmul.f32 %v462, 1.442695
    %v521 = vpow.pop %v520
    %v522 = vmul.f32 %v467, 1.442695
    %v523 = vpow.pop %v522
    %v524 = vmul.f32 %v472, 1.442695
    %v525 = vpow.pop %v524
    %v526 = vmul.f32 %v477, 1.442695
    %v527 = vpow.pop %v526
    %v528 = vadd.f32 %v497, 1.0
    %v529 = vlog2.pop %v528
    %v530 = vmul.f32 %v529, 0.6931472
    %v531 = vmul.f32 -0.5, %v497
    %v532 = vadd.f32 %v531, 1.0
    %v533 = vmul.f32 %v532, %v497
    %v534 = vand.u32 2147483647, %v497
    %vm535 = vcmp.lt.f32.partialorder %v534, 0.0004427343
    %v536 = vsel %vm535, %v533, %v530
    %v537 = vadd.f32 %v499, 1.0
    %v538 = vlog2.pop %v537
    %v539 = vmul.f32 %v538, 0.6931472
    %v540 = vmul.f32 -0.5, %v499
    %v541 = vadd.f32 %v540, 1.0
    %v542 = vmul.f32 %v541, %v499
    %v543 = vand.u32 2147483647, %v499
    %vm544 = vcmp.lt.f32.partialorder %v543, 0.0004427343
    %v545 = vsel %vm544, %v542, %v539
    %v546 = vadd.f32 %v501, 1.0
    %v547 = vlog2.pop %v546
    %v548 = vmul.f32 %v547, 0.6931472
    %v549 = vmul.f32 -0.5, %v501
    %v550 = vadd.f32 %v549, 1.0
    %v551 = vmul.f32 %v550, %v501
    %v552 = vand.u32 2147483647, %v501
    %vm553 = vcmp.lt.f32.partialorder %v552, 0.0004427343
    %v554 = vsel %vm553, %v551, %v548
    %v555 = vadd.f32 %v503, 1.0
    %v556 = vlog2.pop %v555
    %v557 = vmul.f32 %v556, 0.6931472
    %v558 = vmul.f32 -0.5, %v503
    %v559 = vadd.f32 %v558, 1.0
    %v560 = vmul.f32 %v559, %v503
    %v561 = vand.u32 2147483647, %v503
    %vm562 = vcmp.lt.f32.partialorder %v561, 0.0004427343
    %v563 = vsel %vm562, %v560, %v557
    %v564 = vadd.f32 %v505, 1.0
    %v565 = vlog2.pop %v564
    %v566 = vmul.f32 %v565, 0.6931472
    %v567 = vmul.f32 -0.5, %v505
    %v568 = vadd.f32 %v567, 1.0
    %v569 = vmul.f32 %v568, %v505
    %v570 = vand.u32 2147483647, %v505
    %vm571 = vcmp.lt.f32.partialorder %v570, 0.0004427343
    %v572 = vsel %vm571, %v569, %v566
    %v573 = vadd.f32 %v507, 1.0
    %v574 = vlog2.pop %v573
    %v575 = vmul.f32 %v574, 0.6931472
    %v576 = vmul.f32 -0.5, %v507
    %v577 = vadd.f32 %v576, 1.0
    %v578 = vmul.f32 %v577, %v507
    %v579 = vand.u32 2147483647, %v507
    %vm580 = vcmp.lt.f32.partialorder %v579, 0.0004427343
    %v581 = vsel %vm580, %v578, %v575
    %v582 = vadd.f32 %v509, 1.0
    %v583 = vlog2.pop %v582
    %v584 = vmul.f32 %v583, 0.6931472
    %v585 = vmul.f32 -0.5, %v509
    %v586 = vadd.f32 %v585, 1.0
    %v587 = vmul.f32 %v586, %v509
    %v588 = vand.u32 2147483647, %v509
    %vm589 = vcmp.lt.f32.partialorder %v588, 0.0004427343
    %v590 = vsel %vm589, %v587, %v584
    %v591 = vadd.f32 %v511, 1.0
    %v592 = vlog2.pop %v591
    %v593 = vmul.f32 %v592, 0.6931472
    %v594 = vmul.f32 -0.5, %v511
    %v595 = vadd.f32 %v594, 1.0
    %v596 = vmul.f32 %v595, %v511
    %v597 = vand.u32 2147483647, %v511
    %vm598 = vcmp.lt.f32.partialorder %v597, 0.0004427343
    %v599 = vsel %vm598, %v596, %v593
    %v600 = vadd.f32 %v513, 1.0
    %v601 = vlog2.pop %v600
    %v602 = vmul.f32 %v601, 0.6931472
    %v603 = vmul.f32 -0.5, %v513
    %v604 = vadd.f32 %v603, 1.0
    %v605 = vmul.f32 %v604, %v513
    %v606 = vand.u32 2147483647, %v513
    %vm607 = vcmp.lt.f32.partialorder %v606, 0.0004427343
    %v608 = vsel %vm607, %v605, %v602
    %v609 = vadd.f32 %v515, 1.0
    %v610 = vlog2.pop %v609
    %v611 = vmul.f32 %v610, 0.6931472
    %v612 = vmul.f32 -0.5, %v515
    %v613 = vadd.f32 %v612, 1.0
    %v614 = vmul.f32 %v613, %v515
    %v615 = vand.u32 2147483647, %v515
    %vm616 = vcmp.lt.f32.partialorder %v615, 0.0004427343
    %v617 = vsel %vm616, %v614, %v611
    %v618 = vadd.f32 %v517, 1.0
    %v619 = vlog2.pop %v618
    %v620 = vmul.f32 %v619, 0.6931472
    %v621 = vmul.f32 -0.5, %v517
    %v622 = vadd.f32 %v621, 1.0
    %v623 = vmul.f32 %v622, %v517
    %v624 = vand.u32 2147483647, %v517
    %vm625 = vcmp.lt.f32.partialorder %v624, 0.0004427343
    %v626 = vsel %vm625, %v623, %v620
    %v627 = vadd.f32 %v519, 1.0
    %v628 = vlog2.pop %v627
    %v629 = vmul.f32 %v628, 0.6931472
    %v630 = vmul.f32 -0.5, %v519
    %v631 = vadd.f32 %v630, 1.0
    %v632 = vmul.f32 %v631, %v519
    %v633 = vand.u32 2147483647, %v519
    %vm634 = vcmp.lt.f32.partialorder %v633, 0.0004427343
    %v635 = vsel %vm634, %v632, %v629
    %v636 = vadd.f32 %v521, 1.0
    %v637 = vlog2.pop %v636
    %v638 = vmul.f32 %v637, 0.6931472
    %v639 = vmul.f32 -0.5, %v521
    %v640 = vadd.f32 %v639, 1.0
    %v641 = vmul.f32 %v640, %v521
    %v642 = vand.u32 2147483647, %v521
    %vm643 = vcmp.lt.f32.partialorder %v642, 0.0004427343
    %v644 = vsel %vm643, %v641, %v638
    %v645 = vadd.f32 %v523, 1.0
    %v646 = vlog2.pop %v645
    %v647 = vmul.f32 %v646, 0.6931472
    %v648 = vmul.f32 -0.5, %v523
    %v649 = vadd.f32 %v648, 1.0
    %v650 = vmul.f32 %v649, %v523
    %v651 = vand.u32 2147483647, %v523
    %vm652 = vcmp.lt.f32.partialorder %v651, 0.0004427343
    %v653 = vsel %vm652, %v650, %v647
    %v654 = vadd.f32 %v525, 1.0
    %v655 = vlog2.pop %v654
    %v656 = vmul.f32 %v655, 0.6931472
    %v657 = vmul.f32 -0.5, %v525
    %v658 = vadd.f32 %v657, 1.0
    %v659 = vmul.f32 %v658, %v525
    %v660 = vand.u32 2147483647, %v525
    %vm661 = vcmp.lt.f32.partialorder %v660, 0.0004427343
    %v662 = vsel %vm661, %v659, %v656
    %v663 = vadd.f32 %v527, 1.0
    %v664 = vlog2.pop %v663
    %v665 = vmul.f32 %v664, 0.6931472
    %v666 = vmul.f32 -0.5, %v527
    %v667 = vadd.f32 %v666, 1.0
    %v668 = vmul.f32 %v667, %v527
    %v669 = vand.u32 2147483647, %v527
    %vm670 = vcmp.lt.f32.partialorder %v669, 0.0004427343
    %v671 = vsel %vm670, %v668, %v665
    %v672 = vsel %vm480, %v402, %v536
    %v673 = vsel %vm481, %v407, %v545
    %v674 = vsel %vm482, %v412, %v554
    %v675 = vsel %vm483, %v417, %v563
    %v676 = vsel %vm484, %v422, %v572
    %v677 = vsel %vm485, %v427, %v581
    %v678 = vsel %vm486, %v432, %v590
    %v679 = vsel %vm487, %v437, %v599
    %v680 = vsel %vm488, %v442, %v608
    %v681 = vsel %vm489, %v447, %v617
    %v682 = vsel %vm490, %v452, %v626
    %v683 = vsel %vm491, %v457, %v635
    %v684 = vsel %vm492, %v462, %v644
    %v685 = vsel %vm493, %v467, %v653
    %v686 = vsel %vm494, %v472, %v662
    %v687 = vsel %vm495, %v477, %v671
    %v688 = vld [vmem:[%s3] sm:$0x1]
    %s689 = sld [smem:[#allocation2]]
    %v690 = vstv %s689
    %691 = vmatprep.subr.mxu0 0.0
    %692 = vmatpush1.msra.mxu0 %v672
    %693 = vmatprep.subr.mxu0 0.0
    %694 = vmatpush1.msra.mxu0 %v673
    %695 = vmatprep.subr.mxu0 0.0
    %696 = vmatpush1.msra.mxu0 %v674
    %697 = vmatprep.subr.mxu0 0.0
    %698 = vmatpush1.msra.mxu0 %v675
    %699 = vmatprep.subr.mxu0 0.0
    %700 = vmatpush1.msra.mxu0 %v676
    %701 = vmatprep.subr.mxu0 0.0
    %702 = vmatpush1.msra.mxu0 %v677
    %703 = vmatprep.subr.mxu0 0.0
    %704 = vmatpush1.msra.mxu0 %v678
    %705 = vmatprep.subr.mxu0 0.0
    %706 = vmatpush1.msra.mxu0 %v679
    %707 = vmatprep.subr.mxu0 0.0
    %708 = vmatpush1.msra.mxu0 %v680
    %709 = vmatprep.subr.mxu0 0.0
    %710 = vmatpush1.msra.mxu0 %v681
    %711 = vmatprep.subr.mxu0 0.0
    %712 = vmatpush1.msra.mxu0 %v682
    %713 = vmatprep.subr.mxu0 0.0
    %714 = vmatpush1.msra.mxu0 %v683
    %715 = vmatprep.subr.mxu0 0.0
    %716 = vmatpush1.msra.mxu0 %v684
    %717 = vmatprep.subr.mxu0 0.0
    %718 = vmatpush1.msra.mxu0 %v685
    %719 = vmatprep.subr.mxu0 0.0
    %720 = vmatpush1.msra.mxu0 %v686
    %721 = vmatprep.subr.mxu0 0.0
    %722 = vmatpush1.msra.mxu0 %v687
    %723 = vmatprep.subr.mxu0 0.0
    %724 = vmatpush1.msra.mxu0 0.0
    %725 = vmatprep.subr.mxu0 0.0
    %726 = vmatpush1.msra.mxu0 0.0
    %727 = vmatprep.subr.mxu0 0.0
    %728 = vmatpush1.msra.mxu0 0.0
    %729 = vmatprep.subr.mxu0 0.0
    %730 = vmatpush1.msra.mxu0 0.0
    %731 = vmatprep.subr.mxu0 0.0
    %732 = vmatpush1.msra.mxu0 0.0
    %733 = vmatprep.subr.mxu0 0.0
    %734 = vmatpush1.msra.mxu0 0.0
    %735 = vmatprep.subr.mxu0 0.0
    %736 = vmatpush1.msra.mxu0 0.0
    %737 = vmatprep.subr.mxu0 0.0
    %738 = vmatpush1.msra.mxu0 0.0
    %739 = vmatprep.subr.mxu0 0.0
    %740 = vmatpush1.msra.mxu0 0.0
    %741 = vmatprep.subr.mxu0 0.0
    %742 = vmatpush1.msra.mxu0 0.0
    %743 = vmatprep.subr.mxu0 0.0
    %744 = vmatpush1.msra.mxu0 0.0
    %745 = vmatprep.subr.mxu0 0.0
    %746 = vmatpush1.msra.mxu0 0.0
    %747 = vmatprep.subr.mxu0 0.0
    %748 = vmatpush1.msra.mxu0 0.0
    %749 = vmatprep.subr.mxu0 0.0
    %750 = vmatpush1.msra.mxu0 0.0
    %751 = vmatprep.subr.mxu0 0.0
    %752 = vmatpush1.msra.mxu0 0.0
    %753 = vmatprep.subr.mxu0 0.0
    %754 = vmatpush1.msra.mxu0 0.0
    %755 = vmatprep.mubr.f32.mxu0 0.0
    %756 = vmatmul.mubr.f32.gmra.mrb[0].mxu0 %v688
    %v757 = vpop.f32.mrb[0].mxu0
    %v758 = vadd.f32 %v690, %v757
    %v759 = vpop.f32.mrb[0].mxu0
    %760 = vdwg.mxu0
    %761 = vst [vmem:[#allocation3] sm:$0x1] %v758
    // Predicated region
    $region22: #{tpu_custom_call.1} parent=1 // pred_check
      _
    $region23: #{tpu_custom_call.1} parent=1 // pred_check_branch
      %763 = sbr.rel (0) target = $region25
    $region24: #{tpu_custom_call.1} parent=1 // pred_region
      %s765 = ssub.s32 16, 16
      %766 = vsyncadd [#allocation4], %s765
      %s768 = sshll.u32 [#allocation3], 4
      %s769 = int_to_ptr.vmem [resolvable:$true] %s768
      %771 = dma.vmem_to_hbm [thread:$0]  %s769, 16, %s5, [#allocation4]
    $region25: #{tpu_custom_call.1} parent=1 // pred_fallthru
      _
    // Predicated region
    $region26: #{tpu_custom_call.1} parent=1 // pred_check
      _
    $region27: #{tpu_custom_call.1} parent=1 // pred_check_branch
      %773 = sbr.rel (0) target = $region29
    $region28: #{tpu_custom_call.1} parent=1 // pred_region
      %774 = dma.done [#allocation4], 16
    $region29: #{tpu_custom_call.1} parent=1 // pred_fallthru
      _
    %775 = vsyncpa [#allocation4], 1

</llo_original>
